<compile_context>
chip_gen: v7x
topology: tpu7x:2x2x1
jax: 0.10.0
libtpu: 0.0.40
codegen_flags: <defaults>
</compile_context>

<pallas_src>
import jax
import jax.numpy as jnp
from jax.experimental import pallas as pl
from jax.experimental.pallas import tpu as pltpu


# ---------------------------------------------------------------------------
# Kernel (transposed layout: hidden dim on sublanes, batch on lanes)
# ---------------------------------------------------------------------------
def critic_kernel(sat_ref,                 # (in_dim, TB)  bf16  : [state;action]^T tile
                  w1t_ref, b1_ref,         # (H, in_dim) bf16, (H, 1) f32
                  w2t_ref, b2_ref,         # (H, H)     bf16, (H, 1) f32
                  w3r_ref, b3_ref,         # (1, H)     bf16, (1, 1) f32
                  q_ref):                  # (1, TB)    f32
    bf16 = jnp.bfloat16

    # Layer 1: (H, in_dim) @ (in_dim, TB) -> (H, TB), f32 accumulate, bias + ReLU.
    h1 = jnp.dot(w1t_ref[...], sat_ref[...], preferred_element_type=jnp.float32)
    h1 = jnp.maximum(h1 + b1_ref[...], 0.0)

    # Layer 2: (H, H) @ (H, TB) -> (H, TB).
    h2 = jnp.dot(w2t_ref[...], h1.astype(bf16), preferred_element_type=jnp.float32)
    h2 = jnp.maximum(h2 + b2_ref[...], 0.0)

    # Layer 3 (out_dim = 1): (1, H) @ (H, TB) -> (1, TB); batch on lanes -> dense vst.
    q = jnp.dot(w3r_ref[...], h2.astype(bf16), preferred_element_type=jnp.float32)
    q_ref[...] = (q + b3_ref[...]).astype(q_ref.dtype)


# ---------------------------------------------------------------------------
# Parameter prep (one-time, at init)
# ---------------------------------------------------------------------------
def prepare_params(params):
    """Pre-transpose weights for the batch-on-lanes layout; weights bf16, biases f32."""
    w1, b1, w2, b2, w3, b3 = (params["w1"], params["b1"], params["w2"],
                              params["b2"], params["w3"], params["b3"])
    return {
        "w1t": jnp.asarray(w1.T, jnp.bfloat16),            # (H, in_dim)
        "b1":  jnp.asarray(b1.reshape(-1, 1), jnp.float32),  # (H, 1)
        "w2t": jnp.asarray(w2.T, jnp.bfloat16),            # (H, H)
        "b2":  jnp.asarray(b2.reshape(-1, 1), jnp.float32),  # (H, 1)
        "w3r": jnp.asarray(w3.reshape(1, -1), jnp.bfloat16),  # (1, H)  (== w3.T)
        "b3":  jnp.asarray(b3.reshape(1, 1), jnp.float32),    # (1, 1)
    }


def _round_up(x, m):
    return ((x + m - 1) // m) * m


def _choose_tile(B, block_b):
    """128-aligned batch tile.  If the whole (>=256-row) batch would be a single grid
    step, halve the tile so grid >= 2 and the 'parallel' axis can use both v7x TCs."""
    b_pad128 = _round_up(B, 128)
    tb = min(_round_up(block_b, 128), b_pad128)
    if tb == b_pad128 and tb >= 256 and tb % 256 == 0:
        tb //= 2
    return tb


def _resident_spec(arr):
    """Full-array block with a constant block index -> stays resident in VMEM."""
    return pl.BlockSpec(arr.shape, lambda i: (0, 0))


# ---------------------------------------------------------------------------
# Forward wrapper
# ---------------------------------------------------------------------------
def critic_forward(state, action, prepped, *, block_b=4096):
    """state: (B, Ds), action: (B, Da). Returns q: (B, 1) float32."""
    B, Ds = state.shape
    Da = action.shape[1]
    in_dim = Ds + Da

    TB = _choose_tile(B, block_b)
    G = pl.cdiv(B, TB)
    B_pad = G * TB

    # One fused wrapper pass: concat + bf16 cast + transpose (+ pad the tiny
    # transposed slab).  Kernel streams a lane-dense (in_dim, B_pad) bf16 slab.
    sa_t = jnp.concatenate([state, action], axis=-1).astype(jnp.bfloat16).T
    if B_pad != B:
        sa_t = jnp.pad(sa_t, ((0, 0), (0, B_pad - B)))

    q_t = pl.pallas_call(
        critic_kernel,
        grid=(G,),
        out_shape=jax.ShapeDtypeStruct((1, B_pad), jnp.float32),
        in_specs=[
            pl.BlockSpec((in_dim, TB), lambda i: (0, i)),   # streamed batch columns
            _resident_spec(prepped["w1t"]),
            _resident_spec(prepped["b1"]),
            _resident_spec(prepped["w2t"]),
            _resident_spec(prepped["b2"]),
            _resident_spec(prepped["w3r"]),
            _resident_spec(prepped["b3"]),
        ],
        out_specs=pl.BlockSpec((1, TB), lambda i: (0, i)),
        compiler_params=pltpu.CompilerParams(
            dimension_semantics=("parallel",),
            vmem_limit_bytes=32 * 1024 * 1024),
    )(sa_t,
      prepped["w1t"], prepped["b1"],
      prepped["w2t"], prepped["b2"],
      prepped["w3r"], prepped["b3"])

    # Padded lane columns are garbage-but-finite; slice them off (rows independent).
    return q_t[0, :B].reshape(B, 1)


# ---------------------------------------------------------------------------
# Init + references
# ---------------------------------------------------------------------------
def init_params(key, in_dim, hidden_dim):
    """Mimics torch.nn.Linear default init U[-1/sqrt(fan_in), +1/sqrt(fan_in)]."""
    def linear(key, fan_in, fan_out):
        kw, kb = jax.random.split(key)
        bound = 1.0 / jnp.sqrt(jnp.float32(fan_in))
        w = jax.random.uniform(kw, (fan_in, fan_out), jnp.float32, -bound, bound)
        b = jax.random.uniform(kb, (fan_out,), jnp.float32, -bound, bound)
        return w, b

    k1, k2, k3 = jax.random.split(key, 3)
    w1, b1 = linear(k1, in_dim, hidden_dim)
    w2, b2 = linear(k2, hidden_dim, hidden_dim)
    w3, b3 = linear(k3, hidden_dim, 1)
    return {"w1": w1, "b1": b1, "w2": w2, "b2": b2, "w3": w3, "b3": b3}


def critic_reference(state, action, params):
    """Pure-f32 reference (exact torch semantics)."""
    sa = jnp.concatenate([state, action], axis=-1)
    h1 = jnp.maximum(sa @ params["w1"] + params["b1"], 0.0)
    h2 = jnp.maximum(h1 @ params["w2"] + params["b2"], 0.0)
    return h2 @ params["w3"] + params["b3"]


def critic_reference_matched(state, action, prepped):
    """Reference that replicates the kernel's bf16-stream / f32-accumulate arithmetic."""
    f32 = jnp.float32
    bf16 = jnp.bfloat16
    sa = jnp.concatenate([state, action], axis=-1).astype(bf16).astype(f32)
    h1 = jnp.maximum(sa @ prepped["w1t"].T.astype(f32) + prepped["b1"].reshape(1, -1), 0.0)
    h1 = h1.astype(bf16).astype(f32)
    h2 = jnp.maximum(h1 @ prepped["w2t"].T.astype(f32) + prepped["b2"].reshape(1, -1), 0.0)
    h2 = h2.astype(bf16).astype(f32)
    return h2 @ prepped["w3r"].T.astype(f32) + prepped["b3"].reshape(1, -1)


if __name__ == "__main__":
    state_dim, action_dim, hidden_dim = 12, 4, 32
    in_dim = state_dim + action_dim

    key = jax.random.PRNGKey(0)
    k_s, k_a, k_p = jax.random.split(key, 3)
    params = init_params(k_p, in_dim, hidden_dim)
    prepped = prepare_params(params)

    # 1) Small batch (single grid step, padded lane columns sliced off).
    B = 8
    state = jax.random.normal(k_s, (B, state_dim), jnp.float32)
    action = jax.random.normal(k_a, (B, action_dim), jnp.float32)
    q = jax.block_until_ready(critic_forward(state, action, prepped))
    assert q.shape == (B, 1), q.shape
    assert jnp.allclose(q, critic_reference_matched(state, action, prepped),
                        atol=1e-4, rtol=1e-4)
    assert jnp.allclose(q, critic_reference(state, action, params),
                        atol=5e-2, rtol=5e-2)          # loose: bf16 streaming

    # 2) Non-multiple-of-128 batch, forced multi-step grid (pipelining + resident
    #    weights + padded-column slice-off).
    B2 = 260
    k_s2, k_a2 = jax.random.split(jax.random.PRNGKey(1))
    state2 = jax.random.normal(k_s2, (B2, state_dim), jnp.float32)
    action2 = jax.random.normal(k_a2, (B2, action_dim), jnp.float32)
    q2 = jax.block_until_ready(critic_forward(state2, action2, prepped, block_b=128))
    assert q2.shape == (B2, 1), q2.shape
    assert jnp.allclose(q2, critic_reference_matched(state2, action2, prepped),
                        atol=1e-4, rtol=1e-4)
    assert jnp.allclose(q2, critic_reference(state2, action2, params),
                        atol=5e-2, rtol=5e-2)

    # 3) Batch that fits one tile -> auto-split into 2 grid steps (v7x two-TC path).
    B3 = 512
    k_s3, k_a3 = jax.random.split(jax.random.PRNGKey(2))
    state3 = jax.random.normal(k_s3, (B3, state_dim), jnp.float32)
    action3 = jax.random.normal(k_a3, (B3, action_dim), jnp.float32)
    q3 = jax.block_until_ready(critic_forward(state3, action3, prepped))
    assert q3.shape == (B3, 1), q3.shape
    assert jnp.allclose(q3, critic_reference_matched(state3, action3, prepped),
                        atol=1e-4, rtol=1e-4)

    print("KERNEL_OK")
</pallas_src>

<mosaic_0001>
module attributes {stable_mosaic.version = 11 : i64} {
  func.func @critic_kernel(%arg0: i32, %arg1: memref<16x128xbf16, #tpu.memory_space<vmem>>, %arg2: memref<32x16xbf16, #tpu.memory_space<vmem>>, %arg3: memref<32x1xf32, #tpu.memory_space<vmem>>, %arg4: memref<32x32xbf16, #tpu.memory_space<vmem>>, %arg5: memref<32x1xf32, #tpu.memory_space<vmem>>, %arg6: memref<1x32xbf16, #tpu.memory_space<vmem>>, %arg7: memref<1x1xf32, #tpu.memory_space<vmem>>, %arg8: memref<1x128xf32, #tpu.memory_space<vmem>>) attributes {dimension_semantics = [#tpu.dimension_semantics<parallel>], iteration_bounds = array<i64: 1>, scalar_prefetch = 0 : i64, scratch_operands = 0 : i64, tpu.core_type = #tpu.core_type<tc>, window_params = [{transform_indices = @transform_0, window_bounds = array<i64: 16, 128>}, {pipeline_mode = #tpu.pipeline_mode<synchronous>, transform_indices = @transform_1, window_bounds = array<i64: 32, 16>}, {pipeline_mode = #tpu.pipeline_mode<synchronous>, transform_indices = @transform_2, window_bounds = array<i64: 32, 1>}, {pipeline_mode = #tpu.pipeline_mode<synchronous>, transform_indices = @transform_3, window_bounds = array<i64: 32, 32>}, {pipeline_mode = #tpu.pipeline_mode<synchronous>, transform_indices = @transform_4, window_bounds = array<i64: 32, 1>}, {pipeline_mode = #tpu.pipeline_mode<synchronous>, transform_indices = @transform_5, window_bounds = array<i64: 1, 32>}, {pipeline_mode = #tpu.pipeline_mode<synchronous>, transform_indices = @transform_6, window_bounds = array<i64: 1, 1>}, {transform_indices = @transform_7, window_bounds = array<i64: 1, 128>}]} {
    %c0 = arith.constant 0 : index
    %c0_0 = arith.constant 0 : index
    %0 = vector.load %arg2[%c0, %c0_0] : memref<32x16xbf16, #tpu.memory_space<vmem>>, vector<32x16xbf16>
    %c0_1 = arith.constant 0 : index
    %c0_2 = arith.constant 0 : index
    %1 = vector.load %arg1[%c0_1, %c0_2] : memref<16x128xbf16, #tpu.memory_space<vmem>>, vector<16x128xbf16>
    %cst = arith.constant dense<0.000000e+00> : vector<32x128xf32>
    %2 = tpu.matmul %0, %1, %cst {dimension_numbers = #tpu.dot_dimension_numbers<[1], [0], [0], [1], [0, 0, 1, 1], [], []>} : vector<32x16xbf16>, vector<16x128xbf16>, vector<32x128xf32> -> vector<32x128xf32>
    %c0_3 = arith.constant 0 : index
    %c0_4 = arith.constant 0 : index
    %3 = vector.load %arg3[%c0_3, %c0_4] : memref<32x1xf32, #tpu.memory_space<vmem>>, vector<32x1xf32>
    %4 = vector.broadcast %3 : vector<32x1xf32> to vector<32x128xf32>
    %5 = arith.addf %2, %4 : vector<32x128xf32>
    %cst_5 = arith.constant 0.000000e+00 : f32
    %6 = vector.broadcast %cst_5 : f32 to vector<32x128xf32>
    %7 = arith.maximumf %5, %6 : vector<32x128xf32>
    %c0_6 = arith.constant 0 : index
    %c0_7 = arith.constant 0 : index
    %8 = vector.load %arg4[%c0_6, %c0_7] : memref<32x32xbf16, #tpu.memory_space<vmem>>, vector<32x32xbf16>
    %9 = arith.truncf %7 : vector<32x128xf32> to vector<32x128xbf16>
    %cst_8 = arith.constant dense<0.000000e+00> : vector<32x128xf32>
    %10 = tpu.matmul %8, %9, %cst_8 {dimension_numbers = #tpu.dot_dimension_numbers<[1], [0], [0], [1], [0, 0, 1, 1], [], []>} : vector<32x32xbf16>, vector<32x128xbf16>, vector<32x128xf32> -> vector<32x128xf32>
    %c0_9 = arith.constant 0 : index
    %c0_10 = arith.constant 0 : index
    %11 = vector.load %arg5[%c0_9, %c0_10] : memref<32x1xf32, #tpu.memory_space<vmem>>, vector<32x1xf32>
    %12 = vector.broadcast %11 : vector<32x1xf32> to vector<32x128xf32>
    %13 = arith.addf %10, %12 : vector<32x128xf32>
    %cst_11 = arith.constant 0.000000e+00 : f32
    %14 = vector.broadcast %cst_11 : f32 to vector<32x128xf32>
    %15 = arith.maximumf %13, %14 : vector<32x128xf32>
    %c0_12 = arith.constant 0 : index
    %c0_13 = arith.constant 0 : index
    %16 = vector.load %arg6[%c0_12, %c0_13] : memref<1x32xbf16, #tpu.memory_space<vmem>>, vector<1x32xbf16>
    %17 = arith.truncf %15 : vector<32x128xf32> to vector<32x128xbf16>
    %cst_14 = arith.constant dense<0.000000e+00> : vector<1x128xf32>
    %18 = tpu.matmul %16, %17, %cst_14 {dimension_numbers = #tpu.dot_dimension_numbers<[1], [0], [0], [1], [0, 0, 1, 1], [], []>} : vector<1x32xbf16>, vector<32x128xbf16>, vector<1x128xf32> -> vector<1x128xf32>
    %c0_15 = arith.constant 0 : index
    %c0_16 = arith.constant 0 : index
    %19 = vector.load %arg7[%c0_15, %c0_16] : memref<1x1xf32, #tpu.memory_space<vmem>>, vector<1x1xf32>
    %20 = vector.broadcast %19 : vector<1x1xf32> to vector<1x128xf32>
    %21 = arith.addf %18, %20 : vector<1x128xf32>
    %c0_17 = arith.constant 0 : index
    %c0_18 = arith.constant 0 : index
    %22 = vector.load %arg8[%c0_17, %c0_18] : memref<1x128xf32, #tpu.memory_space<vmem>>, vector<1x128xf32>
    tpu.vector_store %arg8[%c0_17, %c0_18], %21 {strides = array<i32>} : memref<1x128xf32, #tpu.memory_space<vmem>>, vector<1x128xf32>,
    return
  }
  func.func @transform_0(%arg0: i32) -> (i32, i32) {
    %c0_i32 = arith.constant 0 : i32
    %c0_i32_0 = arith.constant 0 : i32
    return %c0_i32, %arg0 : i32, i32
  }
  func.func @transform_1(%arg0: i32) -> (i32, i32) {
    %c0_i32 = arith.constant 0 : i32
    %c0_i32_0 = arith.constant 0 : i32
    %c0_i32_1 = arith.constant 0 : i32
    return %c0_i32, %c0_i32_0 : i32, i32
  }
  func.func @transform_2(%arg0: i32) -> (i32, i32) {
    %c0_i32 = arith.constant 0 : i32
    %c0_i32_0 = arith.constant 0 : i32
    %c0_i32_1 = arith.constant 0 : i32
    return %c0_i32, %c0_i32_0 : i32, i32
  }
  func.func @transform_3(%arg0: i32) -> (i32, i32) {
    %c0_i32 = arith.constant 0 : i32
    %c0_i32_0 = arith.constant 0 : i32
    %c0_i32_1 = arith.constant 0 : i32
    return %c0_i32, %c0_i32_0 : i32, i32
  }
  func.func @transform_4(%arg0: i32) -> (i32, i32) {
    %c0_i32 = arith.constant 0 : i32
    %c0_i32_0 = arith.constant 0 : i32
    %c0_i32_1 = arith.constant 0 : i32
    return %c0_i32, %c0_i32_0 : i32, i32
  }
  func.func @transform_5(%arg0: i32) -> (i32, i32) {
    %c0_i32 = arith.constant 0 : i32
    %c0_i32_0 = arith.constant 0 : i32
    %c0_i32_1 = arith.constant 0 : i32
    return %c0_i32, %c0_i32_0 : i32, i32
  }
  func.func @transform_6(%arg0: i32) -> (i32, i32) {
    %c0_i32 = arith.constant 0 : i32
    %c0_i32_0 = arith.constant 0 : i32
    %c0_i32_1 = arith.constant 0 : i32
    return %c0_i32, %c0_i32_0 : i32, i32
  }
  func.func @transform_7(%arg0: i32) -> (i32, i32) {
    %c0_i32 = arith.constant 0 : i32
    %c0_i32_0 = arith.constant 0 : i32
    return %c0_i32, %arg0 : i32, i32
  }
}

</mosaic_0001>

<llo_original>
// kernel: tpu_custom_call.1
$region0: #{tpu_custom_call.1}
  #allocation0 [shape = 'u32[]', space=smem, size = 0x4, offset = 0x4, fixed_abs, tag = 'smem constant byte address 0x4 - core index']
  #allocation1 [shape = 'u32[144,128]{1,0:T(1,128)}', space=vmem, size = 0x12000, scoped, tag = 'internal scratch']
  #allocation2 [shape = 'f32[1,1]{1,0:T(1,128)S(1)}', space=vmem, size = 0x200, scoped, tag = 'scoped memory for tpu_custom_call.1']
  %s0 = inlined_call_operand.vmem [shape: bf16[16,128], index: 0, kind: input, shape index: {}]
  %s1 = inlined_call_operand.vmem [shape: bf16[32,16], index: 1, kind: input, shape index: {}]
  %s2 = inlined_call_operand.vmem [shape: f32[32,1], index: 2, kind: input, shape index: {}]
  %s3 = inlined_call_operand.vmem [shape: bf16[32,32], index: 3, kind: input, shape index: {}]
  %s4 = inlined_call_operand.vmem [shape: f32[32,1], index: 4, kind: input, shape index: {}]
  %s5 = inlined_call_operand.vmem [shape: bf16[1,32], index: 5, kind: input, shape index: {}]
  %s6 = inlined_call_operand.<no memory space> [shape: f32[1,1], index: 6, kind: input, shape index: {}]
  %s7 = inlined_call_operand.hbm [shape: f32[1,128], index: 7, kind: output, shape index: {}]
  %s8 = sld [smem:[#allocation0]]
  $region38: #{tpu_custom_call.1} parent=0
    _
  %s10 = ssub.s32 1, %s8
  %s11 = scalar_select 0, %s10, %s8
  %v12 = vstv %s6
  %13 = vst [vmem:[#allocation2] sm:$0x1] %v12
  $region1: #{tpu_custom_call.1} parent=0
    #allocation3 [shape = 'u8[512]{0}', space=vmem, size = 0x400, scoped, tag = 'output window, operand 0, single buffered']
    #allocation4 [shape = 's32[1]{0}', space=sflag, size = 0x4, scoped, tag = 'scoped memory for tpu_custom_call.1']
    %14 = vsyncpa [#allocation4], 0
    // Predicated region
    $region2: #{tpu_custom_call.1} parent=1 // pred_check
      _
    $region3: #{tpu_custom_call.1} parent=1 // pred_check_branch
      %16 = sbr.rel (0) target = $region5
    $region4: #{tpu_custom_call.1} parent=1 // pred_region
      _
    $region5: #{tpu_custom_call.1} parent=1 // pred_fallthru
      _
    // Predicated region
    $region6: #{tpu_custom_call.1} parent=1 // pred_check
      _
    $region7: #{tpu_custom_call.1} parent=1 // pred_check_branch
      %18 = sbr.rel (0) target = $region9
    $region8: #{tpu_custom_call.1} parent=1 // pred_region
      _
    $region9: #{tpu_custom_call.1} parent=1 // pred_fallthru
      _
    // Predicated region
    $region10: #{tpu_custom_call.1} parent=1 // pred_check
      _
    $region11: #{tpu_custom_call.1} parent=1 // pred_check_branch
      %20 = sbr.rel (0) target = $region13
    $region12: #{tpu_custom_call.1} parent=1 // pred_region
      _
    $region13: #{tpu_custom_call.1} parent=1 // pred_fallthru
      _
    // Predicated region
    $region14: #{tpu_custom_call.1} parent=1 // pred_check
      _
    $region15: #{tpu_custom_call.1} parent=1 // pred_check_branch
      %22 = sbr.rel (0) target = $region17
    $region16: #{tpu_custom_call.1} parent=1 // pred_region
      _
    $region17: #{tpu_custom_call.1} parent=1 // pred_fallthru
      _
    // Predicated region
    $region18: #{tpu_custom_call.1} parent=1 // pred_check
      _
    $region19: #{tpu_custom_call.1} parent=1 // pred_check_branch
      %24 = sbr.rel (0) target = $region21
    $region20: #{tpu_custom_call.1} parent=1 // pred_region
      _
    $region21: #{tpu_custom_call.1} parent=1 // pred_fallthru
      _
    // Predicated region
    $region22: #{tpu_custom_call.1} parent=1 // pred_check
      _
    $region23: #{tpu_custom_call.1} parent=1 // pred_check_branch
      %26 = sbr.rel (0) target = $region25
    $region24: #{tpu_custom_call.1} parent=1 // pred_region
      _
    $region25: #{tpu_custom_call.1} parent=1 // pred_fallthru
      _
    // Predicated region
    $region26: #{tpu_custom_call.1} parent=1 // pred_check
      _
    $region27: #{tpu_custom_call.1} parent=1 // pred_check_branch
      %28 = sbr.rel (0) target = $region29
    $region28: #{tpu_custom_call.1} parent=1 // pred_region
      _
    $region29: #{tpu_custom_call.1} parent=1 // pred_fallthru
      _
    %v30 = vld [vmem:[%s1] sm:$0xf]
    %v31 = vld [vmem:[%s1 + $0x4] sm:$0xf]
    %v32 = vld [vmem:[%s1 + $0x8] sm:$0xf]
    %v33 = vld [vmem:[%s1 + $0xc] sm:$0xf]
    %v34 = vld [vmem:[%s0] sm:$0xf]
    %v35 = vld [vmem:[%s0 + $0x4] sm:$0xf]
    %v36 = vld [vmem:[%s2] sm:$0xff]
    %v37 = vld [vmem:[%s2 + $0x8] sm:$0xff]
    %v38 = vld [vmem:[%s2 + $0x10] sm:$0xff]
    %v39 = vld [vmem:[%s2 + $0x18] sm:$0xff]
    %41 = vset.pattern.permute.xlu0 0
    %42 = vperm.xlu0 %41, %v36
    %v43 = vpop.permute.xlu0 %42
    %46 = vset.pattern.permute.xlu0 0
    %47 = vperm.xlu0 %46, %v37
    %v48 = vpop.permute.xlu0 %47
    %51 = vset.pattern.permute.xlu0 0
    %52 = vperm.xlu0 %51, %v38
    %v53 = vpop.permute.xlu0 %52
    %56 = vset.pattern.permute.xlu0 0
    %57 = vperm.xlu0 %56, %v39
    %v58 = vpop.permute.xlu0 %57
    %v64 = vunpack.c.l.b16 %v30
    %v65 = vunpack.c.l.b16 %v31
    %v66 = vunpack.c.l.b16 %v32
    %v67 = vunpack.c.l.b16 %v33
    %v68 = vpack.c.b16 %v65, %v64
    %v69 = vpack.c.b16 %v67, %v66
    %v72 = vunpack.c.l.b16 %v34
    %v73 = vunpack.c.l.b16 %v35
    %v74 = vpack.c.b16 %v73, %v72
    %vm76 = vcmask 130048
    %v78 = vsel %vm76, %v68, 0
    %v81 = vsel %vm76, %v69, 0
    %83 = vmatprep.subr.bf16.mxu0 0
    %84 = vmatpush1.bf16.msra.mxu0 %v74
    %85 = vmatprep.subr.bf16.mxu0 0
    %86 = vmatpush1.bf16.msra.mxu0 0
    %87 = vmatprep.subr.bf16.mxu0 0
    %88 = vmatpush1.bf16.msra.mxu0 0
    %89 = vmatprep.subr.bf16.mxu0 0
    %90 = vmatpush1.bf16.msra.mxu0 0
    %91 = vmatprep.subr.bf16.mxu0 0
    %92 = vmatpush1.bf16.msra.mxu0 0
    %93 = vmatprep.subr.bf16.mxu0 0
    %94 = vmatpush1.bf16.msra.mxu0 0
    %95 = vmatprep.subr.bf16.mxu0 0
    %96 = vmatpush1.bf16.msra.mxu0 0
    %97 = vmatprep.subr.bf16.mxu0 0
    %98 = vmatpush1.bf16.msra.mxu0 0
    %99 = vmatprep.subr.bf16.mxu0 0
    %100 = vmatpush1.bf16.msra.mxu0 0
    %101 = vmatprep.subr.bf16.mxu0 0
    %102 = vmatpush1.bf16.msra.mxu0 0
    %103 = vmatprep.subr.bf16.mxu0 0
    %104 = vmatpush1.bf16.msra.mxu0 0
    %105 = vmatprep.subr.bf16.mxu0 0
    %106 = vmatpush1.bf16.msra.mxu0 0
    %107 = vmatprep.subr.bf16.mxu0 0
    %108 = vmatpush1.bf16.msra.mxu0 0
    %109 = vmatprep.subr.bf16.mxu0 0
    %110 = vmatpush1.bf16.msra.mxu0 0
    %111 = vmatprep.subr.bf16.mxu0 0
    %112 = vmatpush1.bf16.msra.mxu0 0
    %113 = vmatprep.subr.bf16.mxu0 0
    %114 = vmatpush1.bf16.msra.mxu0 0
    %115 = vmatprep.mubr.bf16.mxu0 0
    %116 = vmatmul.mubr.bf16.gmra.mrb[0].mxu0 %v78
    %v117 = vpop.f32.mrb[0].mxu0
    %v118 = vadd.f32 %v43, %v117
    %v119 = vpop.f32.mrb[0].mxu0
    %v120 = vpop.f32.mrb[0].mxu0
    %v121 = vadd.f32 %v48, %v120
    %v122 = vpop.f32.mrb[0].mxu0
    %123 = vmatprep.mubr.bf16.mxu0 0
    %124 = vmatmul.mubr.bf16.gmra.mrb[0].mxu0 %v81
    %v125 = vpop.f32.mrb[0].mxu0
    %v126 = vadd.f32 %v53, %v125
    %v127 = vpop.f32.mrb[0].mxu0
    %v128 = vpop.f32.mrb[0].mxu0
    %v129 = vadd.f32 %v58, %v128
    %v130 = vpop.f32.mrb[0].mxu0
    %131 = vdwg.mxu0
    %v132 = vmax.f32 %v118, 0.0
    %v133 = vmax.f32 %v121, 0.0
    %v134 = vmax.f32 %v126, 0.0
    %v135 = vmax.f32 %v129, 0.0
    %v136 = vld [vmem:[%s3] sm:$0xf]
    %v137 = vld [vmem:[%s3 + $0x4] sm:$0xf]
    %v138 = vld [vmem:[%s3 + $0x8] sm:$0xf]
    %v139 = vld [vmem:[%s3 + $0xc] sm:$0xf]
    %v140 = vpack.c.bf16 %v133, %v132
    %v141 = vpack.c.bf16 %v135, %v134
    %v142 = vld [vmem:[%s4] sm:$0xff]
    %v143 = vld [vmem:[%s4 + $0x8] sm:$0xff]
    %v144 = vld [vmem:[%s4 + $0x10] sm:$0xff]
    %v145 = vld [vmem:[%s4 + $0x18] sm:$0xff]
    %147 = vset.pattern.permute.xlu0 0
    %148 = vperm.xlu0 %147, %v142
    %v149 = vpop.permute.xlu0 %148
    %152 = vset.pattern.permute.xlu0 0
    %153 = vperm.xlu0 %152, %v143
    %v154 = vpop.permute.xlu0 %153
    %157 = vset.pattern.permute.xlu0 0
    %158 = vperm.xlu0 %157, %v144
    %v159 = vpop.permute.xlu0 %158
    %162 = vset.pattern.permute.xlu0 0
    %163 = vperm.xlu0 %162, %v145
    %v164 = vpop.permute.xlu0 %163
    %v170 = vunpack.c.l.b16 %v136
    %v171 = vunpack.c.l.b16 %v137
    %v172 = vunpack.c.l.b16 %v138
    %v173 = vunpack.c.l.b16 %v139
    %v174 = vpack.c.b16 %v171, %v170
    %v175 = vpack.c.b16 %v173, %v172
    %vm176 = vcmask 261120
    %v178 = vsel %vm176, %v174, 0
    %v181 = vsel %vm176, %v175, 0
    %183 = vmatprep.subr.bf16.mxu0 0
    %184 = vmatpush1.bf16.msra.mxu0 %v140
    %185 = vmatprep.subr.bf16.mxu0 0
    %186 = vmatpush1.bf16.msra.mxu0 %v141
    %187 = vmatprep.subr.bf16.mxu0 0
    %188 = vmatpush1.bf16.msra.mxu0 0
    %189 = vmatprep.subr.bf16.mxu0 0
    %190 = vmatpush1.bf16.msra.mxu0 0
    %191 = vmatprep.subr.bf16.mxu0 0
    %192 = vmatpush1.bf16.msra.mxu0 0
    %193 = vmatprep.subr.bf16.mxu0 0
    %194 = vmatpush1.bf16.msra.mxu0 0
    %195 = vmatprep.subr.bf16.mxu0 0
    %196 = vmatpush1.bf16.msra.mxu0 0
    %197 = vmatprep.subr.bf16.mxu0 0
    %198 = vmatpush1.bf16.msra.mxu0 0
    %199 = vmatprep.subr.bf16.mxu0 0
    %200 = vmatpush1.bf16.msra.mxu0 0
    %201 = vmatprep.subr.bf16.mxu0 0
    %202 = vmatpush1.bf16.msra.mxu0 0
    %203 = vmatprep.subr.bf16.mxu0 0
    %204 = vmatpush1.bf16.msra.mxu0 0
    %205 = vmatprep.subr.bf16.mxu0 0
    %206 = vmatpush1.bf16.msra.mxu0 0
    %207 = vmatprep.subr.bf16.mxu0 0
    %208 = vmatpush1.bf16.msra.mxu0 0
    %209 = vmatprep.subr.bf16.mxu0 0
    %210 = vmatpush1.bf16.msra.mxu0 0
    %211 = vmatprep.subr.bf16.mxu0 0
    %212 = vmatpush1.bf16.msra.mxu0 0
    %213 = vmatprep.subr.bf16.mxu0 0
    %214 = vmatpush1.bf16.msra.mxu0 0
    %215 = vmatprep.mubr.bf16.mxu0 0
    %216 = vmatmul.mubr.bf16.gmra.mrb[0].mxu0 %v178
    %v217 = vpop.f32.mrb[0].mxu0
    %v218 = vadd.f32 %v149, %v217
    %v219 = vpop.f32.mrb[0].mxu0
    %v220 = vpop.f32.mrb[0].mxu0
    %v221 = vadd.f32 %v154, %v220
    %v222 = vpop.f32.mrb[0].mxu0
    %223 = vmatprep.mubr.bf16.mxu0 0
    %224 = vmatmul.mubr.bf16.gmra.mrb[0].mxu0 %v181
    %v225 = vpop.f32.mrb[0].mxu0
    %v226 = vadd.f32 %v159, %v225
    %v227 = vpop.f32.mrb[0].mxu0
    %v228 = vpop.f32.mrb[0].mxu0
    %v229 = vadd.f32 %v164, %v228
    %v230 = vpop.f32.mrb[0].mxu0
    %231 = vdwg.mxu0
    %v232 = vmax.f32 %v218, 0.0
    %v233 = vmax.f32 %v221, 0.0
    %v234 = vmax.f32 %v226, 0.0
    %v235 = vmax.f32 %v229, 0.0
    %v236 = vld [vmem:[%s5] sm:$0x1]
    %v237 = vpack.c.bf16 %v233, %v232
    %v238 = vpack.c.bf16 %v235, %v234
    %v239 = vld [vmem:[#allocation2] sm:$0x1]
    %241 = vset.pattern.permute.xlu0 0
    %242 = vperm.xlu0 %241, %v239
    %v243 = vpop.permute.xlu0 %242
    %v245 = vlaneseq
    %v246 = vshrl.u32 %v245, 7
    %v247 = vsub.s32 0, %v246
    %v248 = vrot.slane %v243, %v247
    %v250 = vsel %vm176, %v236, 0
    %252 = vmatprep.subr.bf16.mxu0 0
    %253 = vmatpush1.bf16.msra.mxu0 %v237
    %254 = vmatprep.subr.bf16.mxu0 0
    %255 = vmatpush1.bf16.msra.mxu0 %v238
    %256 = vmatprep.subr.bf16.mxu0 0
    %257 = vmatpush1.bf16.msra.mxu0 0
    %258 = vmatprep.subr.bf16.mxu0 0
    %259 = vmatpush1.bf16.msra.mxu0 0
    %260 = vmatprep.subr.bf16.mxu0 0
    %261 = vmatpush1.bf16.msra.mxu0 0
    %262 = vmatprep.subr.bf16.mxu0 0
    %263 = vmatpush1.bf16.msra.mxu0 0
    %264 = vmatprep.subr.bf16.mxu0 0
    %265 = vmatpush1.bf16.msra.mxu0 0
    %266 = vmatprep.subr.bf16.mxu0 0
    %267 = vmatpush1.bf16.msra.mxu0 0
    %268 = vmatprep.subr.bf16.mxu0 0
    %269 = vmatpush1.bf16.msra.mxu0 0
    %270 = vmatprep.subr.bf16.mxu0 0
    %271 = vmatpush1.bf16.msra.mxu0 0
    %272 = vmatprep.subr.bf16.mxu0 0
    %273 = vmatpush1.bf16.msra.mxu0 0
    %274 = vmatprep.subr.bf16.mxu0 0
    %275 = vmatpush1.bf16.msra.mxu0 0
    %276 = vmatprep.subr.bf16.mxu0 0
    %277 = vmatpush1.bf16.msra.mxu0 0
    %278 = vmatprep.subr.bf16.mxu0 0
    %279 = vmatpush1.bf16.msra.mxu0 0
    %280 = vmatprep.subr.bf16.mxu0 0
    %281 = vmatpush1.bf16.msra.mxu0 0
    %282 = vmatprep.subr.bf16.mxu0 0
    %283 = vmatpush1.bf16.msra.mxu0 0
    %284 = vmatprep.mubr.bf16.mxu0 0
    %285 = vmatmul.mubr.bf16.gmra.mrb[0].mxu0 %v250
    %v286 = vpop.f32.mrb[0].mxu0
    %v287 = vadd.f32 %v248, %v286
    %v288 = vpop.f32.mrb[0].mxu0
    %v289 = vpop.f32.mrb[0].mxu0
    %v290 = vpop.f32.mrb[0].mxu0
    %291 = vdwg.mxu0
    %292 = vst [vmem:[#allocation3] sm:$0x1] %v287
    // Predicated region
    $region30: #{tpu_custom_call.1} parent=1 // pred_check
      _
    $region31: #{tpu_custom_call.1} parent=1 // pred_check_branch
      %294 = sbr.rel (0) target = $region33
    $region32: #{tpu_custom_call.1} parent=1 // pred_region
      %s296 = ssub.s32 16, 16
      %297 = vsyncadd [#allocation4], %s296
      %s299 = sshll.u32 [#allocation3], 4
      %s300 = int_to_ptr.vmem [resolvable:$true] %s299
      %302 = dma.vmem_to_hbm [thread:$0]  %s300, 16, %s7, [#allocation4]
    $region33: #{tpu_custom_call.1} parent=1 // pred_fallthru
      _
    // Predicated region
    $region34: #{tpu_custom_call.1} parent=1 // pred_check
      _
    $region35: #{tpu_custom_call.1} parent=1 // pred_check_branch
      %304 = sbr.rel (0) target = $region37
    $region36: #{tpu_custom_call.1} parent=1 // pred_region
      %305 = dma.done [#allocation4], 16
    $region37: #{tpu_custom_call.1} parent=1 // pred_fallthru
      _
    %306 = vsyncpa [#allocation4], 1

</llo_original>
